<compile_context>
chip_gen: v7x
topology: tpu7x:2x2x1
jax: 0.10.0
libtpu: 0.0.40
codegen_flags: <defaults>
</compile_context>

<pallas_src>
import jax
import jax.numpy as jnp
from jax.experimental import pallas as pl
from jax.experimental.pallas import tpu as pltpu

# ----------------------------- model dims ----------------------------------
B, C, H, W = 2, 4, 16, 16          # small image-triplet shapes
D_IN = C * H * W                   # 1024
D_HID = 128
D_EMB = 64
D_EMB_PAD = 128                    # lane-dense (>=128) output width
ROWS = 3 * B                       # 6  (three branches fused into rows)
ROWS_PAD = 8                       # padded to one full f32 sublane tile


# ----------------------------- Pallas kernel --------------------------------
def _triplet_embed_kernel(x1_ref, x2_ref, x3_ref, w1_ref, b1_ref, w2_ref,
                          b2_ref, o_ref, xbuf_ref):
    """Single-step fused triplet embedding.

    x1/x2/x3_ref : (B, D_IN)          f32   flattened inputs
    w1_ref       : (D_IN, D_HID)      bf16  shared layer-1 weights
    b1_ref       : (1, D_HID)         f32
    w2_ref       : (D_HID, D_EMB_PAD) bf16  layer-2 weights, zero-padded lanes
    b2_ref       : (1, D_EMB_PAD)     f32
    o_ref        : (ROWS_PAD, D_EMB_PAD) f32  lane-dense padded output
    xbuf_ref     : (ROWS_PAD, D_IN)   f32   VMEM scratch (branch packing)
    """
    # Pack the three branches (shared weights) into one row-fused buffer.
    xbuf_ref[0 * B:1 * B, :] = x1_ref[...]
    xbuf_ref[1 * B:2 * B, :] = x2_ref[...]
    xbuf_ref[2 * B:3 * B, :] = x3_ref[...]
    xbuf_ref[ROWS:ROWS_PAD, :] = jnp.zeros((ROWS_PAD - ROWS, D_IN), jnp.float32)

    x = xbuf_ref[...].astype(jnp.bfloat16)                 # bf16 into the MXU
    h = jnp.dot(x, w1_ref[...], preferred_element_type=jnp.float32)
    h = jnp.maximum(h + b1_ref[...], 0.0)                  # f32 bias + ReLU (VPU)
    o = jnp.dot(h.astype(jnp.bfloat16), w2_ref[...],
                preferred_element_type=jnp.float32)
    o_ref[...] = o + b2_ref[...]                           # unmasked (8,128) store


def triplet_net(x1, x2, x3, params):
    """Pallas TripletNet forward: returns (emb1, emb2, emb3), each (B, D_EMB)."""
    w1, b1, w2p, b2p = params
    # flatten NCHW -> (B, D_IN), matching torch .view(B, -1)
    x1f = x1.reshape(B, D_IN).astype(jnp.float32)
    x2f = x2.reshape(B, D_IN).astype(jnp.float32)
    x3f = x3.reshape(B, D_IN).astype(jnp.float32)

    cost = pl.CostEstimate(
        flops=2 * ROWS_PAD * D_IN * D_HID + 2 * ROWS_PAD * D_HID * D_EMB_PAD,
        transcendentals=0,
        bytes_accessed=(3 * B * D_IN * 4            # inputs (f32)
                        + D_IN * D_HID * 2          # w1 (bf16)
                        + D_HID * 4                 # b1
                        + D_HID * D_EMB_PAD * 2     # w2 padded (bf16)
                        + D_EMB_PAD * 4             # b2 padded
                        + ROWS_PAD * D_EMB_PAD * 4),  # output
    )

    vmem = pl.BlockSpec(memory_space=pltpu.MemorySpace.VMEM)
    out_full = pl.pallas_call(
        _triplet_embed_kernel,
        out_shape=jax.ShapeDtypeStruct((ROWS_PAD, D_EMB_PAD), jnp.float32),
        in_specs=[vmem] * 7,
        out_specs=vmem,
        scratch_shapes=[pltpu.VMEM((ROWS_PAD, D_IN), jnp.float32)],
        cost_estimate=cost,
    )(x1f, x2f, x3f, w1, b1, w2p, b2p)

    emb = out_full[:ROWS, :D_EMB]                  # strip row / lane padding
    return emb[0:B], emb[B:2 * B], emb[2 * B:3 * B]


# ----------------------------- param init -----------------------------------
def init_params(key):
    k1, k2 = jax.random.split(key)
    w1 = (jax.random.normal(k1, (D_IN, D_HID), jnp.float32)
          * (1.0 / jnp.sqrt(D_IN))).astype(jnp.bfloat16)
    b1 = jnp.zeros((1, D_HID), jnp.float32)
    w2 = (jax.random.normal(k2, (D_HID, D_EMB), jnp.float32)
          * (1.0 / jnp.sqrt(D_HID))).astype(jnp.bfloat16)
    # Pad layer-2 weights/bias to 128 output lanes (zeros) for lane-dense stores.
    w2p = jnp.zeros((D_HID, D_EMB_PAD), jnp.bfloat16).at[:, :D_EMB].set(w2)
    b2p = jnp.zeros((1, D_EMB_PAD), jnp.float32)
    return w1, b1, w2p, b2p


def _reference(x1, x2, x3, params):
    """Pure-JAX reference of the same bf16-weight embedding net."""
    w1, b1, w2p, b2p = params
    w1f = w1.astype(jnp.float32)
    w2f = w2p[:, :D_EMB].astype(jnp.float32)
    b2 = b2p[:, :D_EMB]

    def emb(x):
        xf = x.reshape(B, D_IN).astype(jnp.bfloat16).astype(jnp.float32)
        h = jnp.maximum(xf @ w1f + b1, 0.0)
        hb = h.astype(jnp.bfloat16).astype(jnp.float32)
        return hb @ w2f + b2

    return emb(x1), emb(x2), emb(x3)


# ----------------------------- main ------------------------------------------
if __name__ == "__main__":
    key = jax.random.PRNGKey(0)
    kp, kx1, kx2, kx3 = jax.random.split(key, 4)
    params = init_params(kp)

    x1 = jax.random.normal(kx1, (B, C, H, W), jnp.float32)
    x2 = jax.random.normal(kx2, (B, C, H, W), jnp.float32)
    x3 = jax.random.normal(kx3, (B, C, H, W), jnp.float32)

    o1, o2, o3 = triplet_net(x1, x2, x3, params)
    jax.block_until_ready((o1, o2, o3))

    r1, r2, r3 = _reference(x1, x2, x3, params)
    assert o1.shape == (B, D_EMB) and o2.shape == (B, D_EMB) and o3.shape == (B, D_EMB)
    assert jnp.allclose(o1, r1, atol=1e-2, rtol=1e-2)
    assert jnp.allclose(o2, r2, atol=1e-2, rtol=1e-2)
    assert jnp.allclose(o3, r3, atol=1e-2, rtol=1e-2)

    print("KERNEL_OK")
</pallas_src>

<mosaic_0001>
module attributes {stable_mosaic.version = 11 : i64} {
  func.func @_triplet_embed_kernel(%arg0: memref<2x1024xf32, #tpu.memory_space<vmem>>, %arg1: memref<2x1024xf32, #tpu.memory_space<vmem>>, %arg2: memref<2x1024xf32, #tpu.memory_space<vmem>>, %arg3: memref<1024x128xbf16, #tpu.memory_space<vmem>>, %arg4: memref<1x128xf32, #tpu.memory_space<vmem>>, %arg5: memref<128x128xbf16, #tpu.memory_space<vmem>>, %arg6: memref<1x128xf32, #tpu.memory_space<vmem>>, %arg7: memref<8x128xf32, #tpu.memory_space<vmem>>, %arg8: memref<8x1024xf32, #tpu.memory_space<vmem>>) attributes {dimension_semantics = [], scalar_prefetch = 0 : i64, scratch_operands = 1 : i64, tpu.core_type = #tpu.core_type<tc>} {
    %c0 = arith.constant 0 : index
    %c0_0 = arith.constant 0 : index
    %0 = vector.load %arg0[%c0, %c0_0] : memref<2x1024xf32, #tpu.memory_space<vmem>>, vector<2x1024xf32>
    %c0_1 = arith.constant 0 : index
    %c0_2 = arith.constant 0 : index
    %1 = vector.load %arg8[%c0_1, %c0_2] : memref<8x1024xf32, #tpu.memory_space<vmem>>, vector<2x1024xf32>
    tpu.vector_store %arg8[%c0_1, %c0_2], %0 {strides = array<i32>} : memref<8x1024xf32, #tpu.memory_space<vmem>>, vector<2x1024xf32>,
    %c0_3 = arith.constant 0 : index
    %c0_4 = arith.constant 0 : index
    %2 = vector.load %arg1[%c0_3, %c0_4] : memref<2x1024xf32, #tpu.memory_space<vmem>>, vector<2x1024xf32>
    %c2 = arith.constant 2 : index
    %c0_5 = arith.constant 0 : index
    %3 = vector.load %arg8[%c2, %c0_5] : memref<8x1024xf32, #tpu.memory_space<vmem>>, vector<2x1024xf32>
    tpu.vector_store %arg8[%c2, %c0_5], %2 {strides = array<i32>} : memref<8x1024xf32, #tpu.memory_space<vmem>>, vector<2x1024xf32>,
    %c0_6 = arith.constant 0 : index
    %c0_7 = arith.constant 0 : index
    %4 = vector.load %arg2[%c0_6, %c0_7] : memref<2x1024xf32, #tpu.memory_space<vmem>>, vector<2x1024xf32>
    %c4 = arith.constant 4 : index
    %c0_8 = arith.constant 0 : index
    %5 = vector.load %arg8[%c4, %c0_8] : memref<8x1024xf32, #tpu.memory_space<vmem>>, vector<2x1024xf32>
    tpu.vector_store %arg8[%c4, %c0_8], %4 {strides = array<i32>} : memref<8x1024xf32, #tpu.memory_space<vmem>>, vector<2x1024xf32>,
    %cst = arith.constant 0.000000e+00 : f32
    %6 = vector.broadcast %cst : f32 to vector<2x1024xf32>
    %c6 = arith.constant 6 : index
    %c0_9 = arith.constant 0 : index
    %7 = vector.load %arg8[%c6, %c0_9] : memref<8x1024xf32, #tpu.memory_space<vmem>>, vector<2x1024xf32>
    tpu.vector_store %arg8[%c6, %c0_9], %6 {strides = array<i32>} : memref<8x1024xf32, #tpu.memory_space<vmem>>, vector<2x1024xf32>,
    %c0_10 = arith.constant 0 : index
    %c0_11 = arith.constant 0 : index
    %8 = vector.load %arg8[%c0_10, %c0_11] : memref<8x1024xf32, #tpu.memory_space<vmem>>, vector<8x1024xf32>
    %9 = arith.truncf %8 : vector<8x1024xf32> to vector<8x1024xbf16>
    %c0_12 = arith.constant 0 : index
    %c0_13 = arith.constant 0 : index
    %10 = vector.load %arg3[%c0_12, %c0_13] : memref<1024x128xbf16, #tpu.memory_space<vmem>>, vector<1024x128xbf16>
    %cst_14 = arith.constant dense<0.000000e+00> : vector<8x128xf32>
    %11 = tpu.matmul %9, %10, %cst_14 {dimension_numbers = #tpu.dot_dimension_numbers<[1], [0], [0], [1], [0, 0, 1, 1], [], []>} : vector<8x1024xbf16>, vector<1024x128xbf16>, vector<8x128xf32> -> vector<8x128xf32>
    %c0_15 = arith.constant 0 : index
    %c0_16 = arith.constant 0 : index
    %12 = vector.load %arg4[%c0_15, %c0_16] : memref<1x128xf32, #tpu.memory_space<vmem>>, vector<1x128xf32>
    %13 = vector.broadcast %12 : vector<1x128xf32> to vector<8x128xf32>
    %14 = arith.addf %11, %13 : vector<8x128xf32>
    %cst_17 = arith.constant 0.000000e+00 : f32
    %15 = vector.broadcast %cst_17 : f32 to vector<8x128xf32>
    %16 = arith.maximumf %14, %15 : vector<8x128xf32>
    %17 = arith.truncf %16 : vector<8x128xf32> to vector<8x128xbf16>
    %c0_18 = arith.constant 0 : index
    %c0_19 = arith.constant 0 : index
    %18 = vector.load %arg5[%c0_18, %c0_19] : memref<128x128xbf16, #tpu.memory_space<vmem>>, vector<128x128xbf16>
    %cst_20 = arith.constant dense<0.000000e+00> : vector<8x128xf32>
    %19 = tpu.matmul %17, %18, %cst_20 {dimension_numbers = #tpu.dot_dimension_numbers<[1], [0], [0], [1], [0, 0, 1, 1], [], []>} : vector<8x128xbf16>, vector<128x128xbf16>, vector<8x128xf32> -> vector<8x128xf32>
    %c0_21 = arith.constant 0 : index
    %c0_22 = arith.constant 0 : index
    %20 = vector.load %arg6[%c0_21, %c0_22] : memref<1x128xf32, #tpu.memory_space<vmem>>, vector<1x128xf32>
    %21 = vector.broadcast %20 : vector<1x128xf32> to vector<8x128xf32>
    %22 = arith.addf %19, %21 : vector<8x128xf32>
    %c0_23 = arith.constant 0 : index
    %c0_24 = arith.constant 0 : index
    %23 = vector.load %arg7[%c0_23, %c0_24] : memref<8x128xf32, #tpu.memory_space<vmem>>, vector<8x128xf32>
    tpu.vector_store %arg7[%c0_23, %c0_24], %22 {strides = array<i32>} : memref<8x128xf32, #tpu.memory_space<vmem>>, vector<8x128xf32>,
    return
  }
}

</mosaic_0001>

<llo_original>
// kernel: tpu_custom_call.1
$region0: #{tpu_custom_call.1}
  #allocation0 [shape = 'u32[]', space=smem, size = 0x4, offset = 0x4, fixed_abs, tag = 'smem constant byte address 0x4 - core index']
  #allocation1 [shape = 'u32[144,128]{1,0:T(1,128)}', space=vmem, size = 0x12000, scoped, tag = 'internal scratch']
  #allocation2 [shape = 'f32[8,1024]{1,0:T(8,128)}', space=vmem, size = 0x8000, scoped, tag = 'scratch operand']
  %s0 = inlined_call_operand.hbm [shape: f32[2,1024], index: 0, kind: input, shape index: {}]
  %s1 = inlined_call_operand.hbm [shape: f32[2,1024], index: 1, kind: input, shape index: {}]
  %s2 = inlined_call_operand.hbm [shape: f32[2,1024], index: 2, kind: input, shape index: {}]
  %s3 = inlined_call_operand.hbm [shape: bf16[1024,128], index: 3, kind: input, shape index: {}]
  %s4 = inlined_call_operand.vmem [shape: f32[1,128], index: 4, kind: input, shape index: {}]
  %s5 = inlined_call_operand.hbm [shape: bf16[128,128], index: 5, kind: input, shape index: {}]
  %s6 = inlined_call_operand.vmem [shape: f32[1,128], index: 6, kind: input, shape index: {}]
  %s7 = inlined_call_operand.hbm [shape: f32[8,128], index: 7, kind: output, shape index: {}]
  %s8 = sld [smem:[#allocation0]]
  $region58: #{tpu_custom_call.1} parent=0
    _
  %s10 = ssub.s32 1, %s8
  %s11 = scalar_select 0, %s10, %s8
  $region1: #{tpu_custom_call.1} parent=0
    #allocation3 [shape = 'u8[8192]{0}', space=vmem, size = 0x2000, scoped, tag = 'input window, operand 0, single buffered']
    #allocation4 [shape = 's32[1]{0}', space=sflag, size = 0x4, scoped, tag = 'scoped memory for tpu_custom_call.1']
    #allocation5 [shape = 's32[1]{0}', space=sflag, size = 0x4, scoped, tag = 'scoped memory for tpu_custom_call.1']
    #allocation6 [shape = 'u8[8192]{0}', space=vmem, size = 0x2000, scoped, tag = 'input window, operand 1, single buffered']
    #allocation7 [shape = 's32[1]{0}', space=sflag, size = 0x4, scoped, tag = 'scoped memory for tpu_custom_call.1']
    #allocation8 [shape = 'u8[8192]{0}', space=vmem, size = 0x2000, scoped, tag = 'input window, operand 2, single buffered']
    #allocation9 [shape = 'u8[262144]{0}', space=vmem, size = 0x40000, scoped, tag = 'input window, operand 3, single buffered']
    #allocation10 [shape = 's32[1]{0}', space=sflag, size = 0x4, scoped, tag = 'scoped memory for tpu_custom_call.1']
    #allocation11 [shape = 'u8[32768]{0}', space=vmem, size = 0x8000, scoped, tag = 'input window, operand 5, single buffered']
    #allocation12 [shape = 'u8[4096]{0}', space=vmem, size = 0x1000, scoped, tag = 'output window, operand 0, single buffered']
    %12 = vsyncpa [#allocation4], 0
    %13 = vsyncpa [#allocation7], 0
    %14 = vsyncpa [#allocation10], 0
    %15 = vsyncpa [#allocation5], 0
    // Predicated region
    $region2: #{tpu_custom_call.1} parent=1 // pred_check
      _
    $region3: #{tpu_custom_call.1} parent=1 // pred_check_branch
      %17 = sbr.rel (0) target = $region5
    $region4: #{tpu_custom_call.1} parent=1 // pred_region
      %s19 = ssub.s32 256, 256
      %20 = vsyncadd [#allocation4], %s19
      %s22 = sshll.u32 [#allocation3], 4
      %s23 = int_to_ptr.vmem [resolvable:$true] %s22
      %25 = dma.hbm_to_vmem [thread:$0]  %s0, 256, %s23, [#allocation4]
    $region5: #{tpu_custom_call.1} parent=1 // pred_fallthru
      _
    // Predicated region
    $region6: #{tpu_custom_call.1} parent=1 // pred_check
      _
    $region7: #{tpu_custom_call.1} parent=1 // pred_check_branch
      %27 = sbr.rel (0) target = $region9
    $region8: #{tpu_custom_call.1} parent=1 // pred_region
      %s29 = ssub.s32 256, 256
      %30 = vsyncadd [#allocation7], %s29
      %s32 = sshll.u32 [#allocation6], 4
      %s33 = int_to_ptr.vmem [resolvable:$true] %s32
      %35 = dma.hbm_to_vmem [thread:$0]  %s1, 256, %s33, [#allocation7]
    $region9: #{tpu_custom_call.1} parent=1 // pred_fallthru
      _
    // Predicated region
    $region10: #{tpu_custom_call.1} parent=1 // pred_check
      _
    $region11: #{tpu_custom_call.1} parent=1 // pred_check_branch
      %37 = sbr.rel (0) target = $region13
    $region12: #{tpu_custom_call.1} parent=1 // pred_region
      %s39 = ssub.s32 256, 256
      %40 = vsyncadd [#allocation7], %s39
      %s42 = sshll.u32 [#allocation8], 4
      %s43 = int_to_ptr.vmem [resolvable:$true] %s42
      %45 = dma.hbm_to_vmem [thread:$0]  %s2, 256, %s43, [#allocation7]
    $region13: #{tpu_custom_call.1} parent=1 // pred_fallthru
      _
    // Predicated region
    $region14: #{tpu_custom_call.1} parent=1 // pred_check
      _
    $region15: #{tpu_custom_call.1} parent=1 // pred_check_branch
      %47 = sbr.rel (0) target = $region17
    $region16: #{tpu_custom_call.1} parent=1 // pred_region
      %s49 = ssub.s32 8192, 8192
      %50 = vsyncadd [#allocation10], %s49
      %s51 = sshll.u32 [#allocation9], 4
      %s52 = int_to_ptr.vmem [resolvable:$true] %s51
      %57 = dma.hbm_to_vmem [thread:$0]  %s3, 8192, %s52, [#allocation10], 64, 64, 4
    $region17: #{tpu_custom_call.1} parent=1 // pred_fallthru
      _
    // Predicated region
    $region18: #{tpu_custom_call.1} parent=1 // pred_check
      _
    $region19: #{tpu_custom_call.1} parent=1 // pred_check_branch
      %59 = sbr.rel (0) target = $region21
    $region20: #{tpu_custom_call.1} parent=1 // pred_region
      _
    $region21: #{tpu_custom_call.1} parent=1 // pred_fallthru
      _
    // Predicated region
    $region22: #{tpu_custom_call.1} parent=1 // pred_check
      _
    $region23: #{tpu_custom_call.1} parent=1 // pred_check_branch
      %61 = sbr.rel (0) target = $region25
    $region24: #{tpu_custom_call.1} parent=1 // pred_region
      %s63 = ssub.s32 1024, 1024
      %64 = vsyncadd [#allocation10], %s63
      %s65 = sshll.u32 [#allocation11], 4
      %s66 = int_to_ptr.vmem [resolvable:$true] %s65
      %71 = dma.hbm_to_vmem [thread:$0]  %s5, 1024, %s66, [#allocation10], 64, 64, 4
    $region25: #{tpu_custom_call.1} parent=1 // pred_fallthru
      _
    // Predicated region
    $region26: #{tpu_custom_call.1} parent=1 // pred_check
      _
    $region27: #{tpu_custom_call.1} parent=1 // pred_check_branch
      %73 = sbr.rel (0) target = $region29
    $region28: #{tpu_custom_call.1} parent=1 // pred_region
      _
    $region29: #{tpu_custom_call.1} parent=1 // pred_fallthru
      _
    // Predicated region
    $region30: #{tpu_custom_call.1} parent=1 // pred_check
      _
    $region31: #{tpu_custom_call.1} parent=1 // pred_check_branch
      %75 = sbr.rel (0) target = $region33
    $region32: #{tpu_custom_call.1} parent=1 // pred_region
      %76 = dma.done [#allocation4], 256
    $region33: #{tpu_custom_call.1} parent=1 // pred_fallthru
      _
    // Predicated region
    $region34: #{tpu_custom_call.1} parent=1 // pred_check
      _
    $region35: #{tpu_custom_call.1} parent=1 // pred_check_branch
      %78 = sbr.rel (0) target = $region37
    $region36: #{tpu_custom_call.1} parent=1 // pred_region
      %79 = dma.done [#allocation7], 256
    $region37: #{tpu_custom_call.1} parent=1 // pred_fallthru
      _
    // Predicated region
    $region38: #{tpu_custom_call.1} parent=1 // pred_check
      _
    $region39: #{tpu_custom_call.1} parent=1 // pred_check_branch
      %81 = sbr.rel (0) target = $region41
    $region40: #{tpu_custom_call.1} parent=1 // pred_region
      %82 = dma.done [#allocation7], 256
    $region41: #{tpu_custom_call.1} parent=1 // pred_fallthru
      _
    // Predicated region
    $region42: #{tpu_custom_call.1} parent=1 // pred_check
      _
    $region43: #{tpu_custom_call.1} parent=1 // pred_check_branch
      %84 = sbr.rel (0) target = $region45
    $region44: #{tpu_custom_call.1} parent=1 // pred_region
      %85 = dma.done [#allocation10], 8192
    $region45: #{tpu_custom_call.1} parent=1 // pred_fallthru
      _
    // Predicated region
    $region46: #{tpu_custom_call.1} parent=1 // pred_check
      _
    $region47: #{tpu_custom_call.1} parent=1 // pred_check_branch
      %87 = sbr.rel (0) target = $region49
    $region48: #{tpu_custom_call.1} parent=1 // pred_region
      %88 = dma.done [#allocation10], 1024
    $region49: #{tpu_custom_call.1} parent=1 // pred_fallthru
      _
    %v90 = vld [vmem:[#allocation3] sm:$0xff]
    %v91 = vld [vmem:[#allocation3 + $0x8] sm:$0xff]
    %v94 = vcombine.high %v90, %v90
    %v96 = vunpack.c.l.s4 1983009808
    %v97 = vunpack.c.0.s8 %v96
    %v98 = vlaneseq
    %v99 = vshrl.u32 %v98, 7
    %v100 = vsub.s32 %v97, %v99
    %v101 = vrot.slane %v90, %v100
    %v103 = vunpack.c.l.s4 1983009808
    %v104 = vunpack.c.0.s8 %v103
    %v105 = vlaneseq
    %v106 = vshrl.u32 %v105, 7
    %v107 = vsub.s32 %v104, %v106
    %v108 = vrot.slane %v94, %v107
    %v109 = vcombine.high %v101, %v101
    %v110 = vcombine.high %v108, %v108
    %v111 = vcombine.high %v91, %v91
    %v113 = vunpack.c.l.s4 1983009808
    %v114 = vunpack.c.0.s8 %v113
    %v115 = vlaneseq
    %v116 = vshrl.u32 %v115, 7
    %v117 = vsub.s32 %v114, %v116
    %v118 = vrot.slane %v91, %v117
    %v120 = vunpack.c.l.s4 1983009808
    %v121 = vunpack.c.0.s8 %v120
    %v122 = vlaneseq
    %v123 = vshrl.u32 %v122, 7
    %v124 = vsub.s32 %v121, %v123
    %v125 = vrot.slane %v111, %v124
    %v126 = vcombine.high %v118, %v118
    %v127 = vcombine.high %v125, %v125
    %136 = vst [vmem:[#allocation2] sm:$0x3] %v101
    %137 = vst [vmem:[#allocation2 + $0x8] sm:$0x3] %v109
    %138 = vst [vmem:[#allocation2 + $0x10] sm:$0x3] %v108
    %139 = vst [vmem:[#allocation2 + $0x18] sm:$0x3] %v110
    %140 = vst [vmem:[#allocation2 + $0x20] sm:$0x3] %v118
    %141 = vst [vmem:[#allocation2 + $0x28] sm:$0x3] %v126
    %142 = vst [vmem:[#allocation2 + $0x30] sm:$0x3] %v125
    %143 = vst [vmem:[#allocation2 + $0x38] sm:$0x3] %v127
    %v144 = vld [vmem:[#allocation6] sm:$0xff]
    %v145 = vld [vmem:[#allocation6 + $0x8] sm:$0xff]
    %v148 = vcombine.low %v144, %v144
    %v150 = vunpack.c.l.s4 1983009808
    %v151 = vunpack.c.0.s8 %v150
    %v152 = vlaneseq
    %v153 = vshrl.u32 %v152, 7
    %v154 = vsub.s32 %v151, %v153
    %v155 = vrot.slane %v148, %v154
    %v157 = vunpack.c.l.s4 1983009808
    %v158 = vunpack.c.0.s8 %v157
    %v159 = vlaneseq
    %v160 = vshrl.u32 %v159, 7
    %v161 = vsub.s32 %v158, %v160
    %v162 = vrot.slane %v144, %v161
    %v163 = vcombine.high %v155, %v155
    %v164 = vcombine.high %v162, %v162
    %v165 = vcombine.low %v145, %v145
    %v167 = vunpack.c.l.s4 1983009808
    %v168 = vunpack.c.0.s8 %v167
    %v169 = vlaneseq
    %v170 = vshrl.u32 %v169, 7
    %v171 = vsub.s32 %v168, %v170
    %v172 = vrot.slane %v165, %v171
    %v174 = vunpack.c.l.s4 1983009808
    %v175 = vunpack.c.0.s8 %v174
    %v176 = vlaneseq
    %v177 = vshrl.u32 %v176, 7
    %v178 = vsub.s32 %v175, %v177
    %v179 = vrot.slane %v145, %v178
    %v180 = vcombine.high %v172, %v172
    %v181 = vcombine.high %v179, %v179
    %190 = vst [vmem:[#allocation2] sm:$0xc] %v155
    %191 = vst [vmem:[#allocation2 + $0x8] sm:$0xc] %v163
    %192 = vst [vmem:[#allocation2 + $0x10] sm:$0xc] %v162
    %193 = vst [vmem:[#allocation2 + $0x18] sm:$0xc] %v164
    %194 = vst [vmem:[#allocation2 + $0x20] sm:$0xc] %v172
    %195 = vst [vmem:[#allocation2 + $0x28] sm:$0xc] %v180
    %196 = vst [vmem:[#allocation2 + $0x30] sm:$0xc] %v179
    %197 = vst [vmem:[#allocation2 + $0x38] sm:$0xc] %v181
    %v198 = vld [vmem:[#allocation8] sm:$0xff]
    %v199 = vld [vmem:[#allocation8 + $0x8] sm:$0xff]
    %v202 = vcombine.high %v198, %v198
    %v204 = vunpack.c.l.s4 1983009808
    %v205 = vunpack.c.0.s8 %v204
    %v206 = vlaneseq
    %v207 = vshrl.u32 %v206, 7
    %v208 = vsub.s32 %v205, %v207
    %v209 = vrot.slane %v198, %v208
    %v211 = vunpack.c.l.s4 1983009808
    %v212 = vunpack.c.0.s8 %v211
    %v213 = vlaneseq
    %v214 = vshrl.u32 %v213, 7
    %v215 = vsub.s32 %v212, %v214
    %v216 = vrot.slane %v202, %v215
    %v217 = vcombine.low %v209, %v209
    %v218 = vcombine.low %v216, %v216
    %v219 = vcombine.high %v199, %v199
    %v221 = vunpack.c.l.s4 1983009808
    %v222 = vunpack.c.0.s8 %v221
    %v223 = vlaneseq
    %v224 = vshrl.u32 %v223, 7
    %v225 = vsub.s32 %v222, %v224
    %v226 = vrot.slane %v199, %v225
    %v228 = vunpack.c.l.s4 1983009808
    %v229 = vunpack.c.0.s8 %v228
    %v230 = vlaneseq
    %v231 = vshrl.u32 %v230, 7
    %v232 = vsub.s32 %v229, %v231
    %v233 = vrot.slane %v219, %v232
    %v234 = vcombine.low %v226, %v226
    %v235 = vcombine.low %v233, %v233
    %244 = vst [vmem:[#allocation2] sm:$0x30] %v217
    %245 = vst [vmem:[#allocation2 + $0x8] sm:$0x30] %v209
    %246 = vst [vmem:[#allocation2 + $0x10] sm:$0x30] %v218
    %247 = vst [vmem:[#allocation2 + $0x18] sm:$0x30] %v216
    %248 = vst [vmem:[#allocation2 + $0x20] sm:$0x30] %v234
    %249 = vst [vmem:[#allocation2 + $0x28] sm:$0x30] %v226
    %250 = vst [vmem:[#allocation2 + $0x30] sm:$0x30] %v235
    %251 = vst [vmem:[#allocation2 + $0x38] sm:$0x30] %v233
    %252 = vst [vmem:[#allocation2] sm:$0xc0] 0.0
    %253 = vst [vmem:[#allocation2 + $0x8] sm:$0xc0] 0.0
    %254 = vst [vmem:[#allocation2 + $0x10] sm:$0xc0] 0.0
    %255 = vst [vmem:[#allocation2 + $0x18] sm:$0xc0] 0.0
    %256 = vst [vmem:[#allocation2 + $0x20] sm:$0xc0] 0.0
    %257 = vst [vmem:[#allocation2 + $0x28] sm:$0xc0] 0.0
    %258 = vst [vmem:[#allocation2 + $0x30] sm:$0xc0] 0.0
    %259 = vst [vmem:[#allocation2 + $0x38] sm:$0xc0] 0.0
    %v260 = vld [vmem:[#allocation2] sm:$0xff]
    %v261 = vld [vmem:[#allocation2 + $0x8] sm:$0xff]
    %v262 = vld [vmem:[#allocation2 + $0x10] sm:$0xff]
    %v263 = vld [vmem:[#allocation2 + $0x18] sm:$0xff]
    %v264 = vld [vmem:[#allocation2 + $0x20] sm:$0xff]
    %v265 = vld [vmem:[#allocation2 + $0x28] sm:$0xff]
    %v266 = vld [vmem:[#allocation2 + $0x30] sm:$0xff]
    %v267 = vld [vmem:[#allocation2 + $0x38] sm:$0xff]
    %v268 = vpack.c.bf16 %v260, %v260
    %v269 = vpack.c.bf16 %v261, %v261
    %v270 = vpack.c.bf16 %v262, %v262
    %v271 = vpack.c.bf16 %v263, %v263
    %v272 = vpack.c.bf16 %v264, %v264
    %v273 = vpack.c.bf16 %v265, %v265
    %v274 = vpack.c.bf16 %v266, %v266
    %v275 = vpack.c.bf16 %v267, %v267
    %v276 = vld [vmem:[#allocation9] sm:$0xf]
    %v277 = vld [vmem:[#allocation9 + $0x4] sm:$0xf]
    %v278 = vld [vmem:[#allocation9 + $0x8] sm:$0xf]
    %v279 = vld [vmem:[#allocation9 + $0xc] sm:$0xf]
    %v280 = vld [vmem:[#allocation9 + $0x10] sm:$0xf]
    %v281 = vld [vmem:[#allocation9 + $0x14] sm:$0xf]
    %v282 = vld [vmem:[#allocation9 + $0x18] sm:$0xf]
    %v283 = vld [vmem:[#allocation9 + $0x1c] sm:$0xf]
    %v284 = vld [vmem:[#allocation9 + $0x20] sm:$0xf]
    %v285 = vld [vmem:[#allocation9 + $0x24] sm:$0xf]
    %v286 = vld [vmem:[#allocation9 + $0x28] sm:$0xf]
    %v287 = vld [vmem:[#allocation9 + $0x2c] sm:$0xf]
    %v288 = vld [vmem:[#allocation9 + $0x30] sm:$0xf]
    %v289 = vld [vmem:[#allocation9 + $0x34] sm:$0xf]
    %v290 = vld [vmem:[#allocation9 + $0x38] sm:$0xf]
    %v291 = vld [vmem:[#allocation9 + $0x3c] sm:$0xf]
    %v292 = vld [vmem:[#allocation9 + $0x40] sm:$0xf]
    %v293 = vld [vmem:[#allocation9 + $0x44] sm:$0xf]
    %v294 = vld [vmem:[#allocation9 + $0x48] sm:$0xf]
    %v295 = vld [vmem:[#allocation9 + $0x4c] sm:$0xf]
    %v296 = vld [vmem:[#allocation9 + $0x50] sm:$0xf]
    %v297 = vld [vmem:[#allocation9 + $0x54] sm:$0xf]
    %v298 = vld [vmem:[#allocation9 + $0x58] sm:$0xf]
    %v299 = vld [vmem:[#allocation9 + $0x5c] sm:$0xf]
    %v300 = vld [vmem:[#allocation9 + $0x60] sm:$0xf]
    %v301 = vld [vmem:[#allocation9 + $0x64] sm:$0xf]
    %v302 = vld [vmem:[#allocation9 + $0x68] sm:$0xf]
    %v303 = vld [vmem:[#allocation9 + $0x6c] sm:$0xf]
    %v304 = vld [vmem:[#allocation9 + $0x70] sm:$0xf]
    %v305 = vld [vmem:[#allocation9 + $0x74] sm:$0xf]
    %v306 = vld [vmem:[#allocation9 + $0x78] sm:$0xf]
    %v307 = vld [vmem:[#allocation9 + $0x7c] sm:$0xf]
    %v308 = vld [vmem:[#allocation9 + $0x80] sm:$0xf]
    %v309 = vld [vmem:[#allocation9 + $0x84] sm:$0xf]
    %v310 = vld [vmem:[#allocation9 + $0x88] sm:$0xf]
    %v311 = vld [vmem:[#allocation9 + $0x8c] sm:$0xf]
    %v312 = vld [vmem:[#allocation9 + $0x90] sm:$0xf]
    %v313 = vld [vmem:[#allocation9 + $0x94] sm:$0xf]
    %v314 = vld [vmem:[#allocation9 + $0x98] sm:$0xf]
    %v315 = vld [vmem:[#allocation9 + $0x9c] sm:$0xf]
    %v316 = vld [vmem:[#allocation9 + $0xa0] sm:$0xf]
    %v317 = vld [vmem:[#allocation9 + $0xa4] sm:$0xf]
    %v318 = vld [vmem:[#allocation9 + $0xa8] sm:$0xf]
    %v319 = vld [vmem:[#allocation9 + $0xac] sm:$0xf]
    %v320 = vld [vmem:[#allocation9 + $0xb0] sm:$0xf]
    %v321 = vld [vmem:[#allocation9 + $0xb4] sm:$0xf]
    %v322 = vld [vmem:[#allocation9 + $0xb8] sm:$0xf]
    %v323 = vld [vmem:[#allocation9 + $0xbc] sm:$0xf]
    %v324 = vld [vmem:[#allocation9 + $0xc0] sm:$0xf]
    %v325 = vld [vmem:[#allocation9 + $0xc4] sm:$0xf]
    %v326 = vld [vmem:[#allocation9 + $0xc8] sm:$0xf]
    %v327 = vld [vmem:[#allocation9 + $0xcc] sm:$0xf]
    %v328 = vld [vmem:[#allocation9 + $0xd0] sm:$0xf]
    %v329 = vld [vmem:[#allocation9 + $0xd4] sm:$0xf]
    %v330 = vld [vmem:[#allocation9 + $0xd8] sm:$0xf]
    %v331 = vld [vmem:[#allocation9 + $0xdc] sm:$0xf]
    %v332 = vld [vmem:[#allocation9 + $0xe0] sm:$0xf]
    %v333 = vld [vmem:[#allocation9 + $0xe4] sm:$0xf]
    %v334 = vld [vmem:[#allocation9 + $0xe8] sm:$0xf]
    %v335 = vld [vmem:[#allocation9 + $0xec] sm:$0xf]
    %v336 = vld [vmem:[#allocation9 + $0xf0] sm:$0xf]
    %v337 = vld [vmem:[#allocation9 + $0xf4] sm:$0xf]
    %v338 = vld [vmem:[#allocation9 + $0xf8] sm:$0xf]
    %v339 = vld [vmem:[#allocation9 + $0xfc] sm:$0xf]
    %v340 = vld [vmem:[#allocation9 + $0x100] sm:$0xf]
    %v341 = vld [vmem:[#allocation9 + $0x104] sm:$0xf]
    %v342 = vld [vmem:[#allocation9 + $0x108] sm:$0xf]
    %v343 = vld [vmem:[#allocation9 + $0x10c] sm:$0xf]
    %v344 = vld [vmem:[#allocation9 + $0x110] sm:$0xf]
    %v345 = vld [vmem:[#allocation9 + $0x114] sm:$0xf]
    %v346 = vld [vmem:[#allocation9 + $0x118] sm:$0xf]
    %v347 = vld [vmem:[#allocation9 + $0x11c] sm:$0xf]
    %v348 = vld [vmem:[#allocation9 + $0x120] sm:$0xf]
    %v349 = vld [vmem:[#allocation9 + $0x124] sm:$0xf]
    %v350 = vld [vmem:[#allocation9 + $0x128] sm:$0xf]
    %v351 = vld [vmem:[#allocation9 + $0x12c] sm:$0xf]
    %v352 = vld [vmem:[#allocation9 + $0x130] sm:$0xf]
    %v353 = vld [vmem:[#allocation9 + $0x134] sm:$0xf]
    %v354 = vld [vmem:[#allocation9 + $0x138] sm:$0xf]
    %v355 = vld [vmem:[#allocation9 + $0x13c] sm:$0xf]
    %v356 = vld [vmem:[#allocation9 + $0x140] sm:$0xf]
    %v357 = vld [vmem:[#allocation9 + $0x144] sm:$0xf]
    %v358 = vld [vmem:[#allocation9 + $0x148] sm:$0xf]
    %v359 = vld [vmem:[#allocation9 + $0x14c] sm:$0xf]
    %v360 = vld [vmem:[#allocation9 + $0x150] sm:$0xf]
    %v361 = vld [vmem:[#allocation9 + $0x154] sm:$0xf]
    %v362 = vld [vmem:[#allocation9 + $0x158] sm:$0xf]
    %v363 = vld [vmem:[#allocation9 + $0x15c] sm:$0xf]
    %v364 = vld [vmem:[#allocation9 + $0x160] sm:$0xf]
    %v365 = vld [vmem:[#allocation9 + $0x164] sm:$0xf]
    %v366 = vld [vmem:[#allocation9 + $0x168] sm:$0xf]
    %v367 = vld [vmem:[#allocation9 + $0x16c] sm:$0xf]
    %v368 = vld [vmem:[#allocation9 + $0x170] sm:$0xf]
    %v369 = vld [vmem:[#allocation9 + $0x174] sm:$0xf]
    %v370 = vld [vmem:[#allocation9 + $0x178] sm:$0xf]
    %v371 = vld [vmem:[#allocation9 + $0x17c] sm:$0xf]
    %v372 = vld [vmem:[#allocation9 + $0x180] sm:$0xf]
    %v373 = vld [vmem:[#allocation9 + $0x184] sm:$0xf]
    %v374 = vld [vmem:[#allocation9 + $0x188] sm:$0xf]
    %v375 = vld [vmem:[#allocation9 + $0x18c] sm:$0xf]
    %v376 = vld [vmem:[#allocation9 + $0x190] sm:$0xf]
    %v377 = vld [vmem:[#allocation9 + $0x194] sm:$0xf]
    %v378 = vld [vmem:[#allocation9 + $0x198] sm:$0xf]
    %v379 = vld [vmem:[#allocation9 + $0x19c] sm:$0xf]
    %v380 = vld [vmem:[#allocation9 + $0x1a0] sm:$0xf]
    %v381 = vld [vmem:[#allocation9 + $0x1a4] sm:$0xf]
    %v382 = vld [vmem:[#allocation9 + $0x1a8] sm:$0xf]
    %v383 = vld [vmem:[#allocation9 + $0x1ac] sm:$0xf]
    %v384 = vld [vmem:[#allocation9 + $0x1b0] sm:$0xf]
    %v385 = vld [vmem:[#allocation9 + $0x1b4] sm:$0xf]
    %v386 = vld [vmem:[#allocation9 + $0x1b8] sm:$0xf]
    %v387 = vld [vmem:[#allocation9 + $0x1bc] sm:$0xf]
    %v388 = vld [vmem:[#allocation9 + $0x1c0] sm:$0xf]
    %v389 = vld [vmem:[#allocation9 + $0x1c4] sm:$0xf]
    %v390 = vld [vmem:[#allocation9 + $0x1c8] sm:$0xf]
    %v391 = vld [vmem:[#allocation9 + $0x1cc] sm:$0xf]
    %v392 = vld [vmem:[#allocation9 + $0x1d0] sm:$0xf]
    %v393 = vld [vmem:[#allocation9 + $0x1d4] sm:$0xf]
    %v394 = vld [vmem:[#allocation9 + $0x1d8] sm:$0xf]
    %v395 = vld [vmem:[#allocation9 + $0x1dc] sm:$0xf]
    %v396 = vld [vmem:[#allocation9 + $0x1e0] sm:$0xf]
    %v397 = vld [vmem:[#allocation9 + $0x1e4] sm:$0xf]
    %v398 = vld [vmem:[#allocation9 + $0x1e8] sm:$0xf]
    %v399 = vld [vmem:[#allocation9 + $0x1ec] sm:$0xf]
    %v400 = vld [vmem:[#allocation9 + $0x1f0] sm:$0xf]
    %v401 = vld [vmem:[#allocation9 + $0x1f4] sm:$0xf]
    %v402 = vld [vmem:[#allocation9 + $0x1f8] sm:$0xf]
    %v403 = vld [vmem:[#allocation9 + $0x1fc] sm:$0xf]
    %v404 = vld [vmem:[%s4] sm:$0x1]
    %v406 = vlaneseq
    %v407 = vshrl.u32 %v406, 7
    %v408 = vsub.s32 0, %v407
    %v409 = vrot.slane %v404, %v408
    %v539 = vunpack.c.l.b16 %v276
    %v540 = vunpack.c.l.b16 %v277
    %v541 = vunpack.c.l.b16 %v278
    %v542 = vunpack.c.l.b16 %v279
    %v543 = vunpack.c.l.b16 %v280
    %v544 = vunpack.c.l.b16 %v281
    %v545 = vunpack.c.l.b16 %v282
    %v546 = vunpack.c.l.b16 %v283
    %v547 = vunpack.c.l.b16 %v284
    %v548 = vunpack.c.l.b16 %v285
    %v549 = vunpack.c.l.b16 %v286
    %v550 = vunpack.c.l.b16 %v287
    %v551 = vunpack.c.l.b16 %v288
    %v552 = vunpack.c.l.b16 %v289
    %v553 = vunpack.c.l.b16 %v290
    %v554 = vunpack.c.l.b16 %v291
    %v555 = vunpack.c.l.b16 %v292
    %v556 = vunpack.c.l.b16 %v293
    %v557 = vunpack.c.l.b16 %v294
    %v558 = vunpack.c.l.b16 %v295
    %v559 = vunpack.c.l.b16 %v296
    %v560 = vunpack.c.l.b16 %v297
    %v561 = vunpack.c.l.b16 %v298
    %v562 = vunpack.c.l.b16 %v299
    %v563 = vunpack.c.l.b16 %v300
    %v564 = vunpack.c.l.b16 %v301
    %v565 = vunpack.c.l.b16 %v302
    %v566 = vunpack.c.l.b16 %v303
    %v567 = vunpack.c.l.b16 %v304
    %v568 = vunpack.c.l.b16 %v305
    %v569 = vunpack.c.l.b16 %v306
    %v570 = vunpack.c.l.b16 %v307
    %v571 = vunpack.c.l.b16 %v308
    %v572 = vunpack.c.l.b16 %v309
    %v573 = vunpack.c.l.b16 %v310
    %v574 = vunpack.c.l.b16 %v311
    %v575 = vunpack.c.l.b16 %v312
    %v576 = vunpack.c.l.b16 %v313
    %v577 = vunpack.c.l.b16 %v314
    %v578 = vunpack.c.l.b16 %v315
    %v579 = vunpack.c.l.b16 %v316
    %v580 = vunpack.c.l.b16 %v317
    %v581 = vunpack.c.l.b16 %v318
    %v582 = vunpack.c.l.b16 %v319
    %v583 = vunpack.c.l.b16 %v320
    %v584 = vunpack.c.l.b16 %v321
    %v585 = vunpack.c.l.b16 %v322
    %v586 = vunpack.c.l.b16 %v323
    %v587 = vunpack.c.l.b16 %v324
    %v588 = vunpack.c.l.b16 %v325
    %v589 = vunpack.c.l.b16 %v326
    %v590 = vunpack.c.l.b16 %v327
    %v591 = vunpack.c.l.b16 %v328
    %v592 = vunpack.c.l.b16 %v329
    %v593 = vunpack.c.l.b16 %v330
    %v594 = vunpack.c.l.b16 %v331
    %v595 = vunpack.c.l.b16 %v332
    %v596 = vunpack.c.l.b16 %v333
    %v597 = vunpack.c.l.b16 %v334
    %v598 = vunpack.c.l.b16 %v335
    %v599 = vunpack.c.l.b16 %v336
    %v600 = vunpack.c.l.b16 %v337
    %v601 = vunpack.c.l.b16 %v338
    %v602 = vunpack.c.l.b16 %v339
    %v603 = vunpack.c.l.b16 %v340
    %v604 = vunpack.c.l.b16 %v341
    %v605 = vunpack.c.l.b16 %v342
    %v606 = vunpack.c.l.b16 %v343
    %v607 = vunpack.c.l.b16 %v344
    %v608 = vunpack.c.l.b16 %v345
    %v609 = vunpack.c.l.b16 %v346
    %v610 = vunpack.c.l.b16 %v347
    %v611 = vunpack.c.l.b16 %v348
    %v612 = vunpack.c.l.b16 %v349
    %v613 = vunpack.c.l.b16 %v350
    %v614 = vunpack.c.l.b16 %v351
    %v615 = vunpack.c.l.b16 %v352
    %v616 = vunpack.c.l.b16 %v353
    %v617 = vunpack.c.l.b16 %v354
    %v618 = vunpack.c.l.b16 %v355
    %v619 = vunpack.c.l.b16 %v356
    %v620 = vunpack.c.l.b16 %v357
    %v621 = vunpack.c.l.b16 %v358
    %v622 = vunpack.c.l.b16 %v359
    %v623 = vunpack.c.l.b16 %v360
    %v624 = vunpack.c.l.b16 %v361
    %v625 = vunpack.c.l.b16 %v362
    %v626 = vunpack.c.l.b16 %v363
    %v627 = vunpack.c.l.b16 %v364
    %v628 = vunpack.c.l.b16 %v365
    %v629 = vunpack.c.l.b16 %v366
    %v630 = vunpack.c.l.b16 %v367
    %v631 = vunpack.c.l.b16 %v368
    %v632 = vunpack.c.l.b16 %v369
    %v633 = vunpack.c.l.b16 %v370
    %v634 = vunpack.c.l.b16 %v371
    %v635 = vunpack.c.l.b16 %v372
    %v636 = vunpack.c.l.b16 %v373
    %v637 = vunpack.c.l.b16 %v374
    %v638 = vunpack.c.l.b16 %v375
    %v639 = vunpack.c.l.b16 %v376
    %v640 = vunpack.c.l.b16 %v377
    %v641 = vunpack.c.l.b16 %v378
    %v642 = vunpack.c.l.b16 %v379
    %v643 = vunpack.c.l.b16 %v380
    %v644 = vunpack.c.l.b16 %v381
    %v645 = vunpack.c.l.b16 %v382
    %v646 = vunpack.c.l.b16 %v383
    %v647 = vunpack.c.l.b16 %v384
    %v648 = vunpack.c.l.b16 %v385
    %v649 = vunpack.c.l.b16 %v386
    %v650 = vunpack.c.l.b16 %v387
    %v651 = vunpack.c.l.b16 %v388
    %v652 = vunpack.c.l.b16 %v389
    %v653 = vunpack.c.l.b16 %v390
    %v654 = vunpack.c.l.b16 %v391
    %v655 = vunpack.c.l.b16 %v392
    %v656 = vunpack.c.l.b16 %v393
    %v657 = vunpack.c.l.b16 %v394
    %v658 = vunpack.c.l.b16 %v395
    %v659 = vunpack.c.l.b16 %v396
    %v660 = vunpack.c.l.b16 %v397
    %v661 = vunpack.c.l.b16 %v398
    %v662 = vunpack.c.l.b16 %v399
    %v663 = vunpack.c.l.b16 %v400
    %v664 = vunpack.c.l.b16 %v401
    %v665 = vunpack.c.l.b16 %v402
    %v666 = vunpack.c.l.b16 %v403
    %v667 = vpack.c.b16 %v540, %v539
    %v668 = vpack.c.b16 %v542, %v541
    %v669 = vpack.c.b16 %v544, %v543
    %v670 = vpack.c.b16 %v546, %v545
    %v671 = vpack.c.b16 %v548, %v547
    %v672 = vpack.c.b16 %v550, %v549
    %v673 = vpack.c.b16 %v552, %v551
    %v674 = vpack.c.b16 %v554, %v553
    %v675 = vpack.c.b16 %v556, %v555
    %v676 = vpack.c.b16 %v558, %v557
    %v677 = vpack.c.b16 %v560, %v559
    %v678 = vpack.c.b16 %v562, %v561
    %v679 = vpack.c.b16 %v564, %v563
    %v680 = vpack.c.b16 %v566, %v565
    %v681 = vpack.c.b16 %v568, %v567
    %v682 = vpack.c.b16 %v570, %v569
    %v683 = vpack.c.b16 %v572, %v571
    %v684 = vpack.c.b16 %v574, %v573
    %v685 = vpack.c.b16 %v576, %v575
    %v686 = vpack.c.b16 %v578, %v577
    %v687 = vpack.c.b16 %v580, %v579
    %v688 = vpack.c.b16 %v582, %v581
    %v689 = vpack.c.b16 %v584, %v583
    %v690 = vpack.c.b16 %v586, %v585
    %v691 = vpack.c.b16 %v588, %v587
    %v692 = vpack.c.b16 %v590, %v589
    %v693 = vpack.c.b16 %v592, %v591
    %v694 = vpack.c.b16 %v594, %v593
    %v695 = vpack.c.b16 %v596, %v595
    %v696 = vpack.c.b16 %v598, %v597
    %v697 = vpack.c.b16 %v600, %v599
    %v698 = vpack.c.b16 %v602, %v601
    %v699 = vpack.c.b16 %v604, %v603
    %v700 = vpack.c.b16 %v606, %v605
    %v701 = vpack.c.b16 %v608, %v607
    %v702 = vpack.c.b16 %v610, %v609
    %v703 = vpack.c.b16 %v612, %v611
    %v704 = vpack.c.b16 %v614, %v613
    %v705 = vpack.c.b16 %v616, %v615
    %v706 = vpack.c.b16 %v618, %v617
    %v707 = vpack.c.b16 %v620, %v619
    %v708 = vpack.c.b16 %v622, %v621
    %v709 = vpack.c.b16 %v624, %v623
    %v710 = vpack.c.b16 %v626, %v625
    %v711 = vpack.c.b16 %v628, %v627
    %v712 = vpack.c.b16 %v630, %v629
    %v713 = vpack.c.b16 %v632, %v631
    %v714 = vpack.c.b16 %v634, %v633
    %v715 = vpack.c.b16 %v636, %v635
    %v716 = vpack.c.b16 %v638, %v637
    %v717 = vpack.c.b16 %v640, %v639
    %v718 = vpack.c.b16 %v642, %v641
    %v719 = vpack.c.b16 %v644, %v643
    %v720 = vpack.c.b16 %v646, %v645
    %v721 = vpack.c.b16 %v648, %v647
    %v722 = vpack.c.b16 %v650, %v649
    %v723 = vpack.c.b16 %v652, %v651
    %v724 = vpack.c.b16 %v654, %v653
    %v725 = vpack.c.b16 %v656, %v655
    %v726 = vpack.c.b16 %v658, %v657
    %v727 = vpack.c.b16 %v660, %v659
    %v728 = vpack.c.b16 %v662, %v661
    %v729 = vpack.c.b16 %v664, %v663
    %v730 = vpack.c.b16 %v666, %v665
    %795 = vmatprep.subr.bf16.mxu0 0
    %796 = vmatpush1.bf16.msra.mxu0 %v667
    %797 = vmatprep.subr.bf16.mxu0 0
    %798 = vmatpush1.bf16.msra.mxu0 %v668
    %799 = vmatprep.subr.bf16.mxu0 0
    %800 = vmatpush1.bf16.msra.mxu0 %v669
    %801 = vmatprep.subr.bf16.mxu0 0
    %802 = vmatpush1.bf16.msra.mxu0 %v670
    %803 = vmatprep.subr.bf16.mxu0 0
    %804 = vmatpush1.bf16.msra.mxu0 %v671
    %805 = vmatprep.subr.bf16.mxu0 0
    %806 = vmatpush1.bf16.msra.mxu0 %v672
    %807 = vmatprep.subr.bf16.mxu0 0
    %808 = vmatpush1.bf16.msra.mxu0 %v673
    %809 = vmatprep.subr.bf16.mxu0 0
    %810 = vmatpush1.bf16.msra.mxu0 %v674
    %811 = vmatprep.subr.bf16.mxu0 0
    %812 = vmatpush1.bf16.msra.mxu0 %v675
    %813 = vmatprep.subr.bf16.mxu0 0
    %814 = vmatpush1.bf16.msra.mxu0 %v676
    %815 = vmatprep.subr.bf16.mxu0 0
    %816 = vmatpush1.bf16.msra.mxu0 %v677
    %817 = vmatprep.subr.bf16.mxu0 0
    %818 = vmatpush1.bf16.msra.mxu0 %v678
    %819 = vmatprep.subr.bf16.mxu0 0
    %820 = vmatpush1.bf16.msra.mxu0 %v679
    %821 = vmatprep.subr.bf16.mxu0 0
    %822 = vmatpush1.bf16.msra.mxu0 %v680
    %823 = vmatprep.subr.bf16.mxu0 0
    %824 = vmatpush1.bf16.msra.mxu0 %v681
    %825 = vmatprep.subr.bf16.mxu0 0
    %826 = vmatpush1.bf16.msra.mxu0 %v682
    %827 = vmatprep.mubr.bf16.mxu0 %v269
    %828 = vmatmul.mubr.bf16.gmra.mrb[0].mxu0 %v268
    %v829 = vpop.f32.mrb[0].mxu0
    %v830 = vadd.f32 %v409, %v829
    %v831 = vpop.f32.mrb[0].mxu0
    %v832 = vpop.f32.mrb[0].mxu0
    %v833 = vpop.f32.mrb[0].mxu0
    %834 = vdwg.mxu0
    %835 = vmatprep.subr.bf16.mxu0 0
    %836 = vmatpush1.bf16.msra.mxu0 %v683
    %837 = vmatprep.subr.bf16.mxu0 0
    %838 = vmatpush1.bf16.msra.mxu0 %v684
    %839 = vmatprep.subr.bf16.mxu0 0
    %840 = vmatpush1.bf16.msra.mxu0 %v685
    %841 = vmatprep.subr.bf16.mxu0 0
    %842 = vmatpush1.bf16.msra.mxu0 %v686
    %843 = vmatprep.subr.bf16.mxu0 0
    %844 = vmatpush1.bf16.msra.mxu0 %v687
    %845 = vmatprep.subr.bf16.mxu0 0
    %846 = vmatpush1.bf16.msra.mxu0 %v688
    %847 = vmatprep.subr.bf16.mxu0 0
    %848 = vmatpush1.bf16.msra.mxu0 %v689
    %849 = vmatprep.subr.bf16.mxu0 0
    %850 = vmatpush1.bf16.msra.mxu0 %v690
    %851 = vmatprep.subr.bf16.mxu0 0
    %852 = vmatpush1.bf16.msra.mxu0 %v691
    %853 = vmatprep.subr.bf16.mxu0 0
    %854 = vmatpush1.bf16.msra.mxu0 %v692
    %855 = vmatprep.subr.bf16.mxu0 0
    %856 = vmatpush1.bf16.msra.mxu0 %v693
    %857 = vmatprep.subr.bf16.mxu0 0
    %858 = vmatpush1.bf16.msra.mxu0 %v694
    %859 = vmatprep.subr.bf16.mxu0 0
    %860 = vmatpush1.bf16.msra.mxu0 %v695
    %861 = vmatprep.subr.bf16.mxu0 0
    %862 = vmatpush1.bf16.msra.mxu0 %v696
    %863 = vmatprep.subr.bf16.mxu0 0
    %864 = vmatpush1.bf16.msra.mxu0 %v697
    %865 = vmatprep.subr.bf16.mxu0 0
    %866 = vmatpush1.bf16.msra.mxu0 %v698
    %867 = vmatprep.mubr.bf16.mxu0 %v271
    %868 = vmatmul.mubr.bf16.gmra.mrb[0].mxu0 %v270
    %v869 = vpop.f32.mrb[0].mxu0
    %v870 = vadd.f32 %v830, %v869
    %v871 = vpop.f32.mrb[0].mxu0
    %v872 = vpop.f32.mrb[0].mxu0
    %v873 = vpop.f32.mrb[0].mxu0
    %874 = vdwg.mxu0
    %875 = vmatprep.subr.bf16.mxu0 0
    %876 = vmatpush1.bf16.msra.mxu0 %v699
    %877 = vmatprep.subr.bf16.mxu0 0
    %878 = vmatpush1.bf16.msra.mxu0 %v700
    %879 = vmatprep.subr.bf16.mxu0 0
    %880 = vmatpush1.bf16.msra.mxu0 %v701
    %881 = vmatprep.subr.bf16.mxu0 0
    %882 = vmatpush1.bf16.msra.mxu0 %v702
    %883 = vmatprep.subr.bf16.mxu0 0
    %884 = vmatpush1.bf16.msra.mxu0 %v703
    %885 = vmatprep.subr.bf16.mxu0 0
    %886 = vmatpush1.bf16.msra.mxu0 %v704
    %887 = vmatprep.subr.bf16.mxu0 0
    %888 = vmatpush1.bf16.msra.mxu0 %v705
    %889 = vmatprep.subr.bf16.mxu0 0
    %890 = vmatpush1.bf16.msra.mxu0 %v706
    %891 = vmatprep.subr.bf16.mxu0 0
    %892 = vmatpush1.bf16.msra.mxu0 %v707
    %893 = vmatprep.subr.bf16.mxu0 0
    %894 = vmatpush1.bf16.msra.mxu0 %v708
    %895 = vmatprep.subr.bf16.mxu0 0
    %896 = vmatpush1.bf16.msra.mxu0 %v709
    %897 = vmatprep.subr.bf16.mxu0 0
    %898 = vmatpush1.bf16.msra.mxu0 %v710
    %899 = vmatprep.subr.bf16.mxu0 0
    %900 = vmatpush1.bf16.msra.mxu0 %v711
    %901 = vmatprep.subr.bf16.mxu0 0
    %902 = vmatpush1.bf16.msra.mxu0 %v712
    %903 = vmatprep.subr.bf16.mxu0 0
    %904 = vmatpush1.bf16.msra.mxu0 %v713
    %905 = vmatprep.subr.bf16.mxu0 0
    %906 = vmatpush1.bf16.msra.mxu0 %v714
    %907 = vmatprep.mubr.bf16.mxu0 %v273
    %908 = vmatmul.mubr.bf16.gmra.mrb[0].mxu0 %v272
    %v909 = vpop.f32.mrb[0].mxu0
    %v910 = vadd.f32 %v870, %v909
    %v911 = vpop.f32.mrb[0].mxu0
    %v912 = vpop.f32.mrb[0].mxu0
    %v913 = vpop.f32.mrb[0].mxu0
    %914 = vdwg.mxu0
    %915 = vmatprep.subr.bf16.mxu0 0
    %916 = vmatpush1.bf16.msra.mxu0 %v715
    %917 = vmatprep.subr.bf16.mxu0 0
    %918 = vmatpush1.bf16.msra.mxu0 %v716
    %919 = vmatprep.subr.bf16.mxu0 0
    %920 = vmatpush1.bf16.msra.mxu0 %v717
    %921 = vmatprep.subr.bf16.mxu0 0
    %922 = vmatpush1.bf16.msra.mxu0 %v718
    %923 = vmatprep.subr.bf16.mxu0 0
    %924 = vmatpush1.bf16.msra.mxu0 %v719
    %925 = vmatprep.subr.bf16.mxu0 0
    %926 = vmatpush1.bf16.msra.mxu0 %v720
    %927 = vmatprep.subr.bf16.mxu0 0
    %928 = vmatpush1.bf16.msra.mxu0 %v721
    %929 = vmatprep.subr.bf16.mxu0 0
    %930 = vmatpush1.bf16.msra.mxu0 %v722
    %931 = vmatprep.subr.bf16.mxu0 0
    %932 = vmatpush1.bf16.msra.mxu0 %v723
    %933 = vmatprep.subr.bf16.mxu0 0
    %934 = vmatpush1.bf16.msra.mxu0 %v724
    %935 = vmatprep.subr.bf16.mxu0 0
    %936 = vmatpush1.bf16.msra.mxu0 %v725
    %937 = vmatprep.subr.bf16.mxu0 0
    %938 = vmatpush1.bf16.msra.mxu0 %v726
    %939 = vmatprep.subr.bf16.mxu0 0
    %940 = vmatpush1.bf16.msra.mxu0 %v727
    %941 = vmatprep.subr.bf16.mxu0 0
    %942 = vmatpush1.bf16.msra.mxu0 %v728
    %943 = vmatprep.subr.bf16.mxu0 0
    %944 = vmatpush1.bf16.msra.mxu0 %v729
    %945 = vmatprep.subr.bf16.mxu0 0
    %946 = vmatpush1.bf16.msra.mxu0 %v730
    %947 = vmatprep.mubr.bf16.mxu0 %v275
    %948 = vmatmul.mubr.bf16.gmra.mrb[0].mxu0 %v274
    %v949 = vpop.f32.mrb[0].mxu0
    %v950 = vadd.f32 %v910, %v949
    %v951 = vpop.f32.mrb[0].mxu0
    %v952 = vpop.f32.mrb[0].mxu0
    %v953 = vpop.f32.mrb[0].mxu0
    %954 = vdwg.mxu0
    %v955 = vmax.f32 %v950, 0.0
    %v956 = vpack.c.bf16 %v955, %v955
    %v957 = vld [vmem:[#allocation11] sm:$0xf]
    %v958 = vld [vmem:[#allocation11 + $0x4] sm:$0xf]
    %v959 = vld [vmem:[#allocation11 + $0x8] sm:$0xf]
    %v960 = vld [vmem:[#allocation11 + $0xc] sm:$0xf]
    %v961 = vld [vmem:[#allocation11 + $0x10] sm:$0xf]
    %v962 = vld [vmem:[#allocation11 + $0x14] sm:$0xf]
    %v963 = vld [vmem:[#allocation11 + $0x18] sm:$0xf]
    %v964 = vld [vmem:[#allocation11 + $0x1c] sm:$0xf]
    %v965 = vld [vmem:[#allocation11 + $0x20] sm:$0xf]
    %v966 = vld [vmem:[#allocation11 + $0x24] sm:$0xf]
    %v967 = vld [vmem:[#allocation11 + $0x28] sm:$0xf]
    %v968 = vld [vmem:[#allocation11 + $0x2c] sm:$0xf]
    %v969 = vld [vmem:[#allocation11 + $0x30] sm:$0xf]
    %v970 = vld [vmem:[#allocation11 + $0x34] sm:$0xf]
    %v971 = vld [vmem:[#allocation11 + $0x38] sm:$0xf]
    %v972 = vld [vmem:[#allocation11 + $0x3c] sm:$0xf]
    %v973 = vld [vmem:[%s6] sm:$0x1]
    %v975 = vlaneseq
    %v976 = vshrl.u32 %v975, 7
    %v977 = vsub.s32 0, %v976
    %v978 = vrot.slane %v973, %v977
    %v996 = vunpack.c.l.b16 %v957
    %v997 = vunpack.c.l.b16 %v958
    %v998 = vunpack.c.l.b16 %v959
    %v999 = vunpack.c.l.b16 %v960
    %v1000 = vunpack.c.l.b16 %v961
    %v1001 = vunpack.c.l.b16 %v962
    %v1002 = vunpack.c.l.b16 %v963
    %v1003 = vunpack.c.l.b16 %v964
    %v1004 = vunpack.c.l.b16 %v965
    %v1005 = vunpack.c.l.b16 %v966
    %v1006 = vunpack.c.l.b16 %v967
    %v1007 = vunpack.c.l.b16 %v968
    %v1008 = vunpack.c.l.b16 %v969
    %v1009 = vunpack.c.l.b16 %v970
    %v1010 = vunpack.c.l.b16 %v971
    %v1011 = vunpack.c.l.b16 %v972
    %v1012 = vpack.c.b16 %v997, %v996
    %v1013 = vpack.c.b16 %v999, %v998
    %v1014 = vpack.c.b16 %v1001, %v1000
    %v1015 = vpack.c.b16 %v1003, %v1002
    %v1016 = vpack.c.b16 %v1005, %v1004
    %v1017 = vpack.c.b16 %v1007, %v1006
    %v1018 = vpack.c.b16 %v1009, %v1008
    %v1019 = vpack.c.b16 %v1011, %v1010
    %1028 = vmatprep.subr.bf16.mxu0 0
    %1029 = vmatpush1.bf16.msra.mxu0 %v1012
    %1030 = vmatprep.subr.bf16.mxu0 0
    %1031 = vmatpush1.bf16.msra.mxu0 %v1013
    %1032 = vmatprep.subr.bf16.mxu0 0
    %1033 = vmatpush1.bf16.msra.mxu0 %v1014
    %1034 = vmatprep.subr.bf16.mxu0 0
    %1035 = vmatpush1.bf16.msra.mxu0 %v1015
    %1036 = vmatprep.subr.bf16.mxu0 0
    %1037 = vmatpush1.bf16.msra.mxu0 %v1016
    %1038 = vmatprep.subr.bf16.mxu0 0
    %1039 = vmatpush1.bf16.msra.mxu0 %v1017
    %1040 = vmatprep.subr.bf16.mxu0 0
    %1041 = vmatpush1.bf16.msra.mxu0 %v1018
    %1042 = vmatprep.subr.bf16.mxu0 0
    %1043 = vmatpush1.bf16.msra.mxu0 %v1019
    %1044 = vmatprep.subr.bf16.mxu0 0
    %1045 = vmatpush1.bf16.msra.mxu0 0
    %1046 = vmatprep.subr.bf16.mxu0 0
    %1047 = vmatpush1.bf16.msra.mxu0 0
    %1048 = vmatprep.subr.bf16.mxu0 0
    %1049 = vmatpush1.bf16.msra.mxu0 0
    %1050 = vmatprep.subr.bf16.mxu0 0
    %1051 = vmatpush1.bf16.msra.mxu0 0
    %1052 = vmatprep.subr.bf16.mxu0 0
    %1053 = vmatpush1.bf16.msra.mxu0 0
    %1054 = vmatprep.subr.bf16.mxu0 0
    %1055 = vmatpush1.bf16.msra.mxu0 0
    %1056 = vmatprep.subr.bf16.mxu0 0
    %1057 = vmatpush1.bf16.msra.mxu0 0
    %1058 = vmatprep.subr.bf16.mxu0 0
    %1059 = vmatpush1.bf16.msra.mxu0 0
    %1060 = vmatprep.mubr.bf16.mxu0 0
    %1061 = vmatmul.mubr.bf16.gmra.mrb[0].mxu0 %v956
    %v1062 = vpop.f32.mrb[0].mxu0
    %v1063 = vadd.f32 %v978, %v1062
    %v1064 = vpop.f32.mrb[0].mxu0
    %v1065 = vpop.f32.mrb[0].mxu0
    %v1066 = vpop.f32.mrb[0].mxu0
    %1067 = vdwg.mxu0
    %1068 = vst [vmem:[#allocation12] sm:$0xff] %v1063
    // Predicated region
    $region50: #{tpu_custom_call.1} parent=1 // pred_check
      _
    $region51: #{tpu_custom_call.1} parent=1 // pred_check_branch
      %1070 = sbr.rel (0) target = $region53
    $region52: #{tpu_custom_call.1} parent=1 // pred_region
      %s1072 = ssub.s32 128, 128
      %1073 = vsyncadd [#allocation5], %s1072
      %s1075 = sshll.u32 [#allocation12], 4
      %s1076 = int_to_ptr.vmem [resolvable:$true] %s1075
      %1078 = dma.vmem_to_hbm [thread:$0]  %s1076, 128, %s7, [#allocation5]
    $region53: #{tpu_custom_call.1} parent=1 // pred_fallthru
      _
    // Predicated region
    $region54: #{tpu_custom_call.1} parent=1 // pred_check
      _
    $region55: #{tpu_custom_call.1} parent=1 // pred_check_branch
      %1080 = sbr.rel (0) target = $region57
    $region56: #{tpu_custom_call.1} parent=1 // pred_region
      %1081 = dma.done [#allocation5], 128
    $region57: #{tpu_custom_call.1} parent=1 // pred_fallthru
      _
    %1082 = vsyncpa [#allocation4], 1
    %1083 = vsyncpa [#allocation7], 1
    %1084 = vsyncpa [#allocation10], 1
    %1085 = vsyncpa [#allocation5], 1

</llo_original>
